<compile_context>
chip_gen: v6e
topology: v6e:2x2x1
jax: 0.10.0
libtpu: 0.0.40
codegen_flags: <defaults>
</compile_context>

<pallas_src>
import functools

import jax
import jax.numpy as jnp
from jax.experimental import pallas as pl
from jax.experimental.pallas import tpu as pltpu


def _round_up(n, m):
    return ((n + m - 1) // m) * m


# ----------------------------------------------------------------------------
# Deterministic orthogonal init (mirrors nn.init.orthogonal_ semantics, gain=0.1)
# ----------------------------------------------------------------------------
def orthogonal_init(key, shape, gain=0.1):
    rows, cols = shape
    big, small = max(rows, cols), min(rows, cols)
    a = jax.random.normal(key, (big, small), dtype=jnp.float32)
    q, r = jnp.linalg.qr(a)
    d = jnp.diagonal(r)
    # sign correction so the decomposition is unique; guard against zero diag
    q = q * jnp.where(d == 0, 1.0, jnp.sign(d))[None, :]
    if rows < cols:
        q = q.T
    return (gain * q[:rows, :cols]).astype(jnp.float32)


def make_discriminator_params(key, num_inputs, hidden_layer=(64, 64)):
    """Returns weights stored as (in, out) plus (1, out) biases."""
    dims = [num_inputs] + list(hidden_layer) + [1]
    params = []
    for i in range(len(dims) - 1):
        key, kw, kb = jax.random.split(key, 3)
        # torch Linear weight is (out, in); init orthogonal there, then transpose.
        # torch's init_r_ also applies orthogonal_ to bias.view(1, -1).
        w = orthogonal_init(kw, (dims[i + 1], dims[i]), gain=0.1).T  # (in, out)
        b = orthogonal_init(kb, (1, dims[i + 1]), gain=0.1)          # (1, out)
        params.append((w, b))
    return params


# ----------------------------------------------------------------------------
# Fused 3-layer MLP kernel
# ----------------------------------------------------------------------------
def disc_mlp_kernel(x_ref, w1_ref, b1_ref, w2_ref, b2_ref, w3_ref, b3_ref, o_ref):
    # x: (tile, D) bf16, w1/w2: bf16, biases + head row: f32, accumulate in f32.
    x = x_ref[...]
    h1 = jnp.dot(x, w1_ref[...], preferred_element_type=jnp.float32) + b1_ref[...]
    h1 = jnp.maximum(h1, 0.0).astype(jnp.bfloat16)
    h2 = jnp.dot(h1, w2_ref[...], preferred_element_type=jnp.float32) + b2_ref[...]
    h2 = jnp.maximum(h2, 0.0)
    # Head (out_features = 1): contract w3_row (1, H2p) with h2 (tile, H2p)
    # along the feature axis -> lane-dense (1, tile) row, no last-dim-1 store.
    out = jax.lax.dot_general(
        w3_ref[...], h2,
        dimension_numbers=(((1,), (1,)), ((), ())),
        preferred_element_type=jnp.float32,
    ) + b3_ref[...]
    o_ref[...] = out.astype(o_ref.dtype)


# ----------------------------------------------------------------------------
# Wrapper: padding, casting, tiling
# ----------------------------------------------------------------------------
@functools.partial(jax.jit, static_argnames=("tile_b",))
def discriminator_forward(x, params, *, tile_b=512):
    """x: (B, num_inputs) float32 -> (B, 1) float32."""
    (w1, b1), (w2, b2), (w3, b3) = params
    B, D = x.shape
    H1, H2 = w1.shape[1], w2.shape[1]

    # Pad hidden dims to full 128-lane vreg width (exact: zero columns ->
    # relu(0)=0, and the matching zero rows of the next weight contribute 0).
    H1p = _round_up(H1, 128)
    H2p = _round_up(H2, 128)
    w1p = jnp.pad(w1, ((0, 0), (0, H1p - H1))).astype(jnp.bfloat16)      # (D, H1p)
    b1p = jnp.pad(b1, ((0, 0), (0, H1p - H1)))                           # (1, H1p)
    w2p = jnp.pad(w2, ((0, H1p - H1), (0, H2p - H2))).astype(jnp.bfloat16)  # (H1p, H2p)
    b2p = jnp.pad(b2, ((0, 0), (0, H2p - H2)))                           # (1, H2p)
    w3row = jnp.pad(w3.T, ((0, 0), (0, H2p - H2)))                       # (1, H2p) f32
    # b3 stays (1, 1)

    # Batch tiling: one grid step for small batches, otherwise lane-aligned
    # tiles of tile_b rows (multiple of 128 for the lane-dense (1, tile) out).
    if B <= tile_b:
        tile = _round_up(B, 8)        # sublane-align the x tile
        B_pad = tile
    else:
        assert tile_b % 128 == 0, "tile_b must be a multiple of 128"
        tile = tile_b
        B_pad = _round_up(B, tile)
    x_pad = jnp.pad(x, ((0, B_pad - B), (0, 0))).astype(jnp.bfloat16)

    grid = (B_pad // tile,)

    def full_spec(shape):
        return pl.BlockSpec(shape, lambda i: tuple(0 for _ in shape))

    out_row = pl.pallas_call(
        disc_mlp_kernel,
        out_shape=jax.ShapeDtypeStruct((1, B_pad), jnp.float32),
        grid_spec=pl.GridSpec(
            grid=grid,
            in_specs=[
                pl.BlockSpec((tile, D), lambda i: (i, 0)),   # x tile
                full_spec((D, H1p)), full_spec((1, H1p)),    # layer 1 (VMEM-resident)
                full_spec((H1p, H2p)), full_spec((1, H2p)),  # layer 2
                full_spec((1, H2p)), full_spec((1, 1)),      # head
            ],
            out_specs=pl.BlockSpec((1, tile), lambda i: (0, i)),
        ),
        compiler_params=pltpu.CompilerParams(
            dimension_semantics=("parallel",),
        ),
    )(x_pad, w1p, b1p, w2p, b2p, w3row, b3)

    # (1, B_pad) lane-dense row -> (B, 1) column, drop padded rows.
    return out_row[0, :B, None]


# ----------------------------------------------------------------------------
# Pure-JAX f32 reference for sanity checking
# ----------------------------------------------------------------------------
def discriminator_ref(x, params):
    (w1, b1), (w2, b2), (w3, b3) = params
    h = jnp.maximum(x @ w1 + b1, 0.0)
    h = jnp.maximum(h @ w2 + b2, 0.0)
    return h @ w3 + b3


if __name__ == "__main__":
    key = jax.random.PRNGKey(0)
    num_inputs = 32

    k_params, k_x1, k_x2 = jax.random.split(key, 3)
    params = make_discriminator_params(k_params, num_inputs, hidden_layer=(64, 64))

    # Small batch: single-step (whole-batch) path.
    x_small = jax.random.normal(k_x1, (16, num_inputs), dtype=jnp.float32)
    out_small = jax.block_until_ready(discriminator_forward(x_small, params))
    ref_small = discriminator_ref(x_small, params)
    assert out_small.shape == (16, 1)
    assert jnp.allclose(out_small, ref_small, atol=1e-2, rtol=1e-2), \
        "mismatch vs reference (small batch)"

    # Non-divisible batch: tiled + zero-padded path (grid > 1, lane-dense out).
    x_big = jax.random.normal(k_x2, (300, num_inputs), dtype=jnp.float32)
    out_big = jax.block_until_ready(discriminator_forward(x_big, params, tile_b=128))
    ref_big = discriminator_ref(x_big, params)
    assert out_big.shape == (300, 1)
    assert jnp.allclose(out_big, ref_big, atol=1e-2, rtol=1e-2), \
        "mismatch vs reference (tiled batch)"

    # TODO(synk): grad_penalty / compute_disc_reward (autograd-based) are not
    # implemented here; only the forward pass is kernelized.
    print("KERNEL_OK")
</pallas_src>

<mosaic_0001>
module attributes {stable_mosaic.version = 11 : i64} {
  func.func @disc_mlp_kernel(%arg0: i32, %arg1: memref<16x32xbf16, #tpu.memory_space<vmem>>, %arg2: memref<32x128xbf16, #tpu.memory_space<vmem>>, %arg3: memref<1x128xf32, #tpu.memory_space<vmem>>, %arg4: memref<128x128xbf16, #tpu.memory_space<vmem>>, %arg5: memref<1x128xf32, #tpu.memory_space<vmem>>, %arg6: memref<1x128xf32, #tpu.memory_space<vmem>>, %arg7: memref<1x1xf32, #tpu.memory_space<vmem>>, %arg8: memref<1x16xf32, #tpu.memory_space<vmem>>) attributes {dimension_semantics = [#tpu.dimension_semantics<parallel>], iteration_bounds = array<i64: 1>, scalar_prefetch = 0 : i64, scratch_operands = 0 : i64, tpu.core_type = #tpu.core_type<tc>, window_params = [{transform_indices = @transform_0, window_bounds = array<i64: 16, 32>}, {pipeline_mode = #tpu.pipeline_mode<synchronous>, transform_indices = @transform_1, window_bounds = array<i64: 32, 128>}, {pipeline_mode = #tpu.pipeline_mode<synchronous>, transform_indices = @transform_2, window_bounds = array<i64: 1, 128>}, {pipeline_mode = #tpu.pipeline_mode<synchronous>, transform_indices = @transform_3, window_bounds = array<i64: 128, 128>}, {pipeline_mode = #tpu.pipeline_mode<synchronous>, transform_indices = @transform_4, window_bounds = array<i64: 1, 128>}, {pipeline_mode = #tpu.pipeline_mode<synchronous>, transform_indices = @transform_5, window_bounds = array<i64: 1, 128>}, {pipeline_mode = #tpu.pipeline_mode<synchronous>, transform_indices = @transform_6, window_bounds = array<i64: 1, 1>}, {transform_indices = @transform_7, window_bounds = array<i64: 1, 16>}]} {
    %c0 = arith.constant 0 : index
    %c0_0 = arith.constant 0 : index
    %0 = vector.load %arg1[%c0, %c0_0] : memref<16x32xbf16, #tpu.memory_space<vmem>>, vector<16x32xbf16>
    %c0_1 = arith.constant 0 : index
    %c0_2 = arith.constant 0 : index
    %1 = vector.load %arg2[%c0_1, %c0_2] : memref<32x128xbf16, #tpu.memory_space<vmem>>, vector<32x128xbf16>
    %cst = arith.constant dense<0.000000e+00> : vector<16x128xf32>
    %2 = tpu.matmul %0, %1, %cst {dimension_numbers = #tpu.dot_dimension_numbers<[1], [0], [0], [1], [0, 0, 1, 1], [], []>} : vector<16x32xbf16>, vector<32x128xbf16>, vector<16x128xf32> -> vector<16x128xf32>
    %c0_3 = arith.constant 0 : index
    %c0_4 = arith.constant 0 : index
    %3 = vector.load %arg3[%c0_3, %c0_4] : memref<1x128xf32, #tpu.memory_space<vmem>>, vector<1x128xf32>
    %4 = vector.broadcast %3 : vector<1x128xf32> to vector<16x128xf32>
    %5 = arith.addf %2, %4 : vector<16x128xf32>
    %cst_5 = arith.constant 0.000000e+00 : f32
    %6 = vector.broadcast %cst_5 : f32 to vector<16x128xf32>
    %7 = arith.maximumf %5, %6 : vector<16x128xf32>
    %8 = arith.truncf %7 : vector<16x128xf32> to vector<16x128xbf16>
    %c0_6 = arith.constant 0 : index
    %c0_7 = arith.constant 0 : index
    %9 = vector.load %arg4[%c0_6, %c0_7] : memref<128x128xbf16, #tpu.memory_space<vmem>>, vector<128x128xbf16>
    %cst_8 = arith.constant dense<0.000000e+00> : vector<16x128xf32>
    %10 = tpu.matmul %8, %9, %cst_8 {dimension_numbers = #tpu.dot_dimension_numbers<[1], [0], [0], [1], [0, 0, 1, 1], [], []>} : vector<16x128xbf16>, vector<128x128xbf16>, vector<16x128xf32> -> vector<16x128xf32>
    %c0_9 = arith.constant 0 : index
    %c0_10 = arith.constant 0 : index
    %11 = vector.load %arg5[%c0_9, %c0_10] : memref<1x128xf32, #tpu.memory_space<vmem>>, vector<1x128xf32>
    %12 = vector.broadcast %11 : vector<1x128xf32> to vector<16x128xf32>
    %13 = arith.addf %10, %12 : vector<16x128xf32>
    %cst_11 = arith.constant 0.000000e+00 : f32
    %14 = vector.broadcast %cst_11 : f32 to vector<16x128xf32>
    %15 = arith.maximumf %13, %14 : vector<16x128xf32>
    %c0_12 = arith.constant 0 : index
    %c0_13 = arith.constant 0 : index
    %16 = vector.load %arg6[%c0_12, %c0_13] : memref<1x128xf32, #tpu.memory_space<vmem>>, vector<1x128xf32>
    %cst_14 = arith.constant dense<0.000000e+00> : vector<1x16xf32>
    %17 = tpu.matmul %16, %15, %cst_14 {dimension_numbers = #tpu.dot_dimension_numbers<[1], [1], [0], [0], [0, 0, 1, 0], [], []>} : vector<1x128xf32>, vector<16x128xf32>, vector<1x16xf32> -> vector<1x16xf32>
    %c0_15 = arith.constant 0 : index
    %c0_16 = arith.constant 0 : index
    %18 = vector.load %arg7[%c0_15, %c0_16] : memref<1x1xf32, #tpu.memory_space<vmem>>, vector<1x1xf32>
    %19 = vector.broadcast %18 : vector<1x1xf32> to vector<1x16xf32>
    %20 = arith.addf %17, %19 : vector<1x16xf32>
    %c0_17 = arith.constant 0 : index
    %c0_18 = arith.constant 0 : index
    %21 = vector.load %arg8[%c0_17, %c0_18] : memref<1x16xf32, #tpu.memory_space<vmem>>, vector<1x16xf32>
    tpu.vector_store %arg8[%c0_17, %c0_18], %20 {strides = array<i32>} : memref<1x16xf32, #tpu.memory_space<vmem>>, vector<1x16xf32>,
    return
  }
  func.func @transform_0(%arg0: i32) -> (i32, i32) {
    %c0_i32 = arith.constant 0 : i32
    %c0_i32_0 = arith.constant 0 : i32
    return %arg0, %c0_i32 : i32, i32
  }
  func.func @transform_1(%arg0: i32) -> (i32, i32) {
    %c0_i32 = arith.constant 0 : i32
    %c0_i32_0 = arith.constant 0 : i32
    %c0_i32_1 = arith.constant 0 : i32
    return %c0_i32, %c0_i32_0 : i32, i32
  }
  func.func @transform_2(%arg0: i32) -> (i32, i32) {
    %c0_i32 = arith.constant 0 : i32
    %c0_i32_0 = arith.constant 0 : i32
    %c0_i32_1 = arith.constant 0 : i32
    return %c0_i32, %c0_i32_0 : i32, i32
  }
  func.func @transform_3(%arg0: i32) -> (i32, i32) {
    %c0_i32 = arith.constant 0 : i32
    %c0_i32_0 = arith.constant 0 : i32
    %c0_i32_1 = arith.constant 0 : i32
    return %c0_i32, %c0_i32_0 : i32, i32
  }
  func.func @transform_4(%arg0: i32) -> (i32, i32) {
    %c0_i32 = arith.constant 0 : i32
    %c0_i32_0 = arith.constant 0 : i32
    %c0_i32_1 = arith.constant 0 : i32
    return %c0_i32, %c0_i32_0 : i32, i32
  }
  func.func @transform_5(%arg0: i32) -> (i32, i32) {
    %c0_i32 = arith.constant 0 : i32
    %c0_i32_0 = arith.constant 0 : i32
    %c0_i32_1 = arith.constant 0 : i32
    return %c0_i32, %c0_i32_0 : i32, i32
  }
  func.func @transform_6(%arg0: i32) -> (i32, i32) {
    %c0_i32 = arith.constant 0 : i32
    %c0_i32_0 = arith.constant 0 : i32
    %c0_i32_1 = arith.constant 0 : i32
    return %c0_i32, %c0_i32_0 : i32, i32
  }
  func.func @transform_7(%arg0: i32) -> (i32, i32) {
    %c0_i32 = arith.constant 0 : i32
    %c0_i32_0 = arith.constant 0 : i32
    return %c0_i32, %arg0 : i32, i32
  }
}

</mosaic_0001>

<llo_original>
// kernel: discriminator_forward.1
$region0: #{discriminator_forward.1}
  #allocation0 [shape = 'u32[]', space=smem, size = 0x4, offset = 0x4, fixed_abs, tag = 'smem constant byte address 0x4 - core index']
  #allocation1 [shape = 'u32[144,128]{1,0:T(1,128)}', space=vmem, size = 0x12000, scoped, tag = 'internal scratch']
  #allocation2 [shape = 'f32[1,1]{1,0:T(1,128)S(1)}', space=vmem, size = 0x200, scoped, tag = 'scoped memory for discriminator_forward.1']
  %s0 = inlined_call_operand.vmem [shape: bf16[16,32], index: 0, kind: input, shape index: {}]
  %s1 = inlined_call_operand.vmem [shape: bf16[32,128], index: 1, kind: input, shape index: {}]
  %s2 = inlined_call_operand.vmem [shape: f32[1,128], index: 2, kind: input, shape index: {}]
  %s3 = inlined_call_operand.vmem [shape: bf16[128,128], index: 3, kind: input, shape index: {}]
  %s4 = inlined_call_operand.vmem [shape: f32[1,128], index: 4, kind: input, shape index: {}]
  %s5 = inlined_call_operand.vmem [shape: f32[1,128], index: 5, kind: input, shape index: {}]
  %s6 = inlined_call_operand.<no memory space> [shape: f32[1,1], index: 6, kind: input, shape index: {}]
  %s7 = inlined_call_operand.hbm [shape: f32[1,16], index: 7, kind: output, shape index: {}]
  %s8 = sld [smem:[#allocation0]]
  $region38: #{discriminator_forward.1} parent=0
    _
  %s10 = ssub.s32 1, %s8
  %s11 = scalar_select 0, %s10, %s8
  %v12 = vstv %s6
  %13 = vst [vmem:[#allocation2] sm:$0x1] %v12
  $region1: #{discriminator_forward.1} parent=0
    #allocation3 [shape = 'u8[512]{0}', space=vmem, size = 0x400, scoped, tag = 'output window, operand 0, single buffered']
    #allocation4 [shape = 's32[1]{0}', space=sflag, size = 0x4, scoped, tag = 'scoped memory for discriminator_forward.1']
    %14 = vsyncpa [#allocation4], 0
    // Predicated region
    $region2: #{discriminator_forward.1} parent=1 // pred_check
      _
    $region3: #{discriminator_forward.1} parent=1 // pred_check_branch
      %16 = sbr.rel (0) target = $region5
    $region4: #{discriminator_forward.1} parent=1 // pred_region
      _
    $region5: #{discriminator_forward.1} parent=1 // pred_fallthru
      _
    // Predicated region
    $region6: #{discriminator_forward.1} parent=1 // pred_check
      _
    $region7: #{discriminator_forward.1} parent=1 // pred_check_branch
      %18 = sbr.rel (0) target = $region9
    $region8: #{discriminator_forward.1} parent=1 // pred_region
      _
    $region9: #{discriminator_forward.1} parent=1 // pred_fallthru
      _
    // Predicated region
    $region10: #{discriminator_forward.1} parent=1 // pred_check
      _
    $region11: #{discriminator_forward.1} parent=1 // pred_check_branch
      %20 = sbr.rel (0) target = $region13
    $region12: #{discriminator_forward.1} parent=1 // pred_region
      _
    $region13: #{discriminator_forward.1} parent=1 // pred_fallthru
      _
    // Predicated region
    $region14: #{discriminator_forward.1} parent=1 // pred_check
      _
    $region15: #{discriminator_forward.1} parent=1 // pred_check_branch
      %22 = sbr.rel (0) target = $region17
    $region16: #{discriminator_forward.1} parent=1 // pred_region
      _
    $region17: #{discriminator_forward.1} parent=1 // pred_fallthru
      _
    // Predicated region
    $region18: #{discriminator_forward.1} parent=1 // pred_check
      _
    $region19: #{discriminator_forward.1} parent=1 // pred_check_branch
      %24 = sbr.rel (0) target = $region21
    $region20: #{discriminator_forward.1} parent=1 // pred_region
      _
    $region21: #{discriminator_forward.1} parent=1 // pred_fallthru
      _
    // Predicated region
    $region22: #{discriminator_forward.1} parent=1 // pred_check
      _
    $region23: #{discriminator_forward.1} parent=1 // pred_check_branch
      %26 = sbr.rel (0) target = $region25
    $region24: #{discriminator_forward.1} parent=1 // pred_region
      _
    $region25: #{discriminator_forward.1} parent=1 // pred_fallthru
      _
    // Predicated region
    $region26: #{discriminator_forward.1} parent=1 // pred_check
      _
    $region27: #{discriminator_forward.1} parent=1 // pred_check_branch
      %28 = sbr.rel (0) target = $region29
    $region28: #{discriminator_forward.1} parent=1 // pred_region
      _
    $region29: #{discriminator_forward.1} parent=1 // pred_fallthru
      _
    %v30 = vld [vmem:[%s0] sm:$0xf]
    %v31 = vld [vmem:[%s0 + $0x4] sm:$0xf]
    %v32 = vld [vmem:[%s1] sm:$0xf]
    %v33 = vld [vmem:[%s1 + $0x4] sm:$0xf]
    %v34 = vld [vmem:[%s1 + $0x8] sm:$0xf]
    %v35 = vld [vmem:[%s1 + $0xc] sm:$0xf]
    %v36 = vld [vmem:[%s2] sm:$0x1]
    %v38 = vlaneseq
    %v39 = vshrl.u32 %v38, 7
    %v40 = vsub.s32 0, %v39
    %v41 = vrot.slane %v36, %v40
    %v45 = vunpack.c.l.b16 %v30
    %v46 = vunpack.c.l.b16 %v31
    %v47 = vpack.c.b16 %v46, %v45
    %v52 = vunpack.c.l.b16 %v32
    %v53 = vunpack.c.l.b16 %v33
    %v54 = vunpack.c.l.b16 %v34
    %v55 = vunpack.c.l.b16 %v35
    %v56 = vpack.c.b16 %v53, %v52
    %v57 = vpack.c.b16 %v55, %v54
    %vm60 = vcmask 261120
    %v62 = vsel %vm60, %v47, 0
    %64 = vmatprep.subr.bf16.mxu0 0
    %65 = vmatpush1.bf16.msra.mxu0 0
    %66 = vmatprep.subr.bf16.mxu0 0
    %67 = vmatpush1.bf16.msra.mxu0 0
    %68 = vmatprep.subr.bf16.mxu0 0
    %69 = vmatpush1.bf16.msra.mxu0 0
    %70 = vmatprep.subr.bf16.mxu0 0
    %71 = vmatpush1.bf16.msra.mxu0 0
    %72 = vmatprep.subr.bf16.mxu0 0
    %73 = vmatpush1.bf16.msra.mxu0 0
    %74 = vmatprep.subr.bf16.mxu0 0
    %75 = vmatpush1.bf16.msra.mxu0 0
    %76 = vmatprep.subr.bf16.mxu0 0
    %77 = vmatpush1.bf16.msra.mxu0 %v57
    %78 = vmatprep.subr.bf16.mxu0 0
    %79 = vmatpush1.bf16.msra.mxu0 %v56
    %80 = vmatprep.subr.bf16.mxu0 0
    %81 = vmatpush2.bf16.msra.mxu0 0
    %82 = vmatprep.subr.bf16.mxu0 0
    %83 = vmatpush2.bf16.msra.mxu0 0
    %84 = vmatprep.subr.bf16.mxu0 0
    %85 = vmatpush2.bf16.msra.mxu0 0
    %86 = vmatprep.subr.bf16.mxu0 0
    %87 = vmatpush2.bf16.msra.mxu0 0
    %88 = vmatprep.subr.bf16.mxu0 0
    %89 = vmatpush2.bf16.msra.mxu0 0
    %90 = vmatprep.subr.bf16.mxu0 0
    %91 = vmatpush2.bf16.msra.mxu0 0
    %92 = vmatprep.subr.bf16.mxu0 0
    %93 = vmatpush2.bf16.msra.mxu0 0
    %94 = vmatprep.subr.bf16.mxu0 0
    %95 = vmatpush2.bf16.msra.mxu0 0
    %96 = vmatprep.mubr.bf16.mxu0 0
    %97 = vmatmul.mubr.bf16.gmra.mxu0 %v62
    %v98 = vpop.f32.mrf.mxu0
    %v99 = vadd.f32 %v41, %v98
    %v100 = vpop.f32.mrf.mxu0
    %v101 = vpop.f32.mrf.mxu0
    %v102 = vadd.f32 %v41, %v101
    %v103 = vpop.f32.mrf.mxu0
    %104 = vdwg.mxu0
    %v105 = vmax.f32 %v99, 0.0
    %v106 = vmax.f32 %v102, 0.0
    %v107 = vpack.c.bf16 %v106, %v105
    %v108 = vld [vmem:[%s3] sm:$0xf]
    %v109 = vld [vmem:[%s3 + $0x4] sm:$0xf]
    %v110 = vld [vmem:[%s3 + $0x8] sm:$0xf]
    %v111 = vld [vmem:[%s3 + $0xc] sm:$0xf]
    %v112 = vld [vmem:[%s3 + $0x10] sm:$0xf]
    %v113 = vld [vmem:[%s3 + $0x14] sm:$0xf]
    %v114 = vld [vmem:[%s3 + $0x18] sm:$0xf]
    %v115 = vld [vmem:[%s3 + $0x1c] sm:$0xf]
    %v116 = vld [vmem:[%s3 + $0x20] sm:$0xf]
    %v117 = vld [vmem:[%s3 + $0x24] sm:$0xf]
    %v118 = vld [vmem:[%s3 + $0x28] sm:$0xf]
    %v119 = vld [vmem:[%s3 + $0x2c] sm:$0xf]
    %v120 = vld [vmem:[%s3 + $0x30] sm:$0xf]
    %v121 = vld [vmem:[%s3 + $0x34] sm:$0xf]
    %v122 = vld [vmem:[%s3 + $0x38] sm:$0xf]
    %v123 = vld [vmem:[%s3 + $0x3c] sm:$0xf]
    %v124 = vld [vmem:[%s4] sm:$0x1]
    %v126 = vlaneseq
    %v127 = vshrl.u32 %v126, 7
    %v128 = vsub.s32 0, %v127
    %v129 = vrot.slane %v124, %v128
    %v147 = vunpack.c.l.b16 %v108
    %v148 = vunpack.c.l.b16 %v109
    %v149 = vunpack.c.l.b16 %v110
    %v150 = vunpack.c.l.b16 %v111
    %v151 = vunpack.c.l.b16 %v112
    %v152 = vunpack.c.l.b16 %v113
    %v153 = vunpack.c.l.b16 %v114
    %v154 = vunpack.c.l.b16 %v115
    %v155 = vunpack.c.l.b16 %v116
    %v156 = vunpack.c.l.b16 %v117
    %v157 = vunpack.c.l.b16 %v118
    %v158 = vunpack.c.l.b16 %v119
    %v159 = vunpack.c.l.b16 %v120
    %v160 = vunpack.c.l.b16 %v121
    %v161 = vunpack.c.l.b16 %v122
    %v162 = vunpack.c.l.b16 %v123
    %v163 = vpack.c.b16 %v148, %v147
    %v164 = vpack.c.b16 %v150, %v149
    %v165 = vpack.c.b16 %v152, %v151
    %v166 = vpack.c.b16 %v154, %v153
    %v167 = vpack.c.b16 %v156, %v155
    %v168 = vpack.c.b16 %v158, %v157
    %v169 = vpack.c.b16 %v160, %v159
    %v170 = vpack.c.b16 %v162, %v161
    %179 = vmatprep.subr.bf16.mxu0 0
    %180 = vmatpush1.bf16.msra.mxu0 %v170
    %181 = vmatprep.subr.bf16.mxu0 0
    %182 = vmatpush1.bf16.msra.mxu0 %v169
    %183 = vmatprep.subr.bf16.mxu0 0
    %184 = vmatpush1.bf16.msra.mxu0 %v168
    %185 = vmatprep.subr.bf16.mxu0 0
    %186 = vmatpush1.bf16.msra.mxu0 %v167
    %187 = vmatprep.subr.bf16.mxu0 0
    %188 = vmatpush1.bf16.msra.mxu0 %v166
    %189 = vmatprep.subr.bf16.mxu0 0
    %190 = vmatpush1.bf16.msra.mxu0 %v165
    %191 = vmatprep.subr.bf16.mxu0 0
    %192 = vmatpush1.bf16.msra.mxu0 %v164
    %193 = vmatprep.subr.bf16.mxu0 0
    %194 = vmatpush1.bf16.msra.mxu0 %v163
    %195 = vmatprep.subr.bf16.mxu0 0
    %196 = vmatpush2.bf16.msra.mxu0 0
    %197 = vmatprep.subr.bf16.mxu0 0
    %198 = vmatpush2.bf16.msra.mxu0 0
    %199 = vmatprep.subr.bf16.mxu0 0
    %200 = vmatpush2.bf16.msra.mxu0 0
    %201 = vmatprep.subr.bf16.mxu0 0
    %202 = vmatpush2.bf16.msra.mxu0 0
    %203 = vmatprep.subr.bf16.mxu0 0
    %204 = vmatpush2.bf16.msra.mxu0 0
    %205 = vmatprep.subr.bf16.mxu0 0
    %206 = vmatpush2.bf16.msra.mxu0 0
    %207 = vmatprep.subr.bf16.mxu0 0
    %208 = vmatpush2.bf16.msra.mxu0 0
    %209 = vmatprep.subr.bf16.mxu0 0
    %210 = vmatpush2.bf16.msra.mxu0 0
    %211 = vmatprep.mubr.bf16.mxu0 0
    %212 = vmatmul.mubr.bf16.gmra.mxu0 %v107
    %v213 = vpop.f32.mrf.mxu0
    %v214 = vadd.f32 %v129, %v213
    %v215 = vpop.f32.mrf.mxu0
    %v216 = vpop.f32.mrf.mxu0
    %v217 = vadd.f32 %v129, %v216
    %v218 = vpop.f32.mrf.mxu0
    %219 = vdwg.mxu0
    %v220 = vmax.f32 %v214, 0.0
    %v221 = vmax.f32 %v217, 0.0
    %v222 = vld [vmem:[%s5] sm:$0x1]
    %v223 = vld [vmem:[#allocation2] sm:$0x1]
    %225 = vset.pattern.permute.xlu0 0
    %226 = vperm.xlu0 %225, %v223
    %v227 = vpop.permute.xlu0 %226
    %v229 = vlaneseq
    %v230 = vshrl.u32 %v229, 7
    %v231 = vsub.s32 0, %v230
    %v232 = vrot.slane %v227, %v231
    %233 = vmatprep.subr.mxu0 0.0
    %234 = vmatpush1.xpose.msra.mxu0 0.0
    %235 = vmatprep.subr.mxu0 0.0
    %236 = vmatpush1.xpose.msra.mxu0 0.0
    %237 = vmatprep.subr.mxu0 0.0
    %238 = vmatpush1.xpose.msra.mxu0 0.0
    %239 = vmatprep.subr.mxu0 0.0
    %240 = vmatpush1.xpose.msra.mxu0 0.0
    %241 = vmatprep.subr.mxu0 0.0
    %242 = vmatpush1.xpose.msra.mxu0 0.0
    %243 = vmatprep.subr.mxu0 0.0
    %244 = vmatpush1.xpose.msra.mxu0 0.0
    %245 = vmatprep.subr.mxu0 0.0
    %246 = vmatpush1.xpose.msra.mxu0 0.0
    %247 = vmatprep.subr.mxu0 0.0
    %248 = vmatpush1.xpose.msra.mxu0 0.0
    %249 = vmatprep.subr.mxu0 0.0
    %250 = vmatpush1.xpose.msra.mxu0 0.0
    %251 = vmatprep.subr.mxu0 0.0
    %252 = vmatpush1.xpose.msra.mxu0 0.0
    %253 = vmatprep.subr.mxu0 0.0
    %254 = vmatpush1.xpose.msra.mxu0 0.0
    %255 = vmatprep.subr.mxu0 0.0
    %256 = vmatpush1.xpose.msra.mxu0 0.0
    %257 = vmatprep.subr.mxu0 0.0
    %258 = vmatpush1.xpose.msra.mxu0 0.0
    %259 = vmatprep.subr.mxu0 0.0
    %260 = vmatpush1.xpose.msra.mxu0 0.0
    %261 = vmatprep.subr.mxu0 0.0
    %262 = vmatpush1.xpose.msra.mxu0 %v221
    %263 = vmatprep.subr.mxu0 0.0
    %264 = vmatpush1.xpose.msra.mxu0 %v220
    %265 = vmatprep.subr.mxu0 0.0
    %266 = vmatpush2.xpose.msra.mxu0 0.0
    %267 = vmatprep.subr.mxu0 0.0
    %268 = vmatpush2.xpose.msra.mxu0 0.0
    %269 = vmatprep.subr.mxu0 0.0
    %270 = vmatpush2.xpose.msra.mxu0 0.0
    %271 = vmatprep.subr.mxu0 0.0
    %272 = vmatpush2.xpose.msra.mxu0 0.0
    %273 = vmatprep.subr.mxu0 0.0
    %274 = vmatpush2.xpose.msra.mxu0 0.0
    %275 = vmatprep.subr.mxu0 0.0
    %276 = vmatpush2.xpose.msra.mxu0 0.0
    %277 = vmatprep.subr.mxu0 0.0
    %278 = vmatpush2.xpose.msra.mxu0 0.0
    %279 = vmatprep.subr.mxu0 0.0
    %280 = vmatpush2.xpose.msra.mxu0 0.0
    %281 = vmatprep.subr.mxu0 0.0
    %282 = vmatpush2.xpose.msra.mxu0 0.0
    %283 = vmatprep.subr.mxu0 0.0
    %284 = vmatpush2.xpose.msra.mxu0 0.0
    %285 = vmatprep.subr.mxu0 0.0
    %286 = vmatpush2.xpose.msra.mxu0 0.0
    %287 = vmatprep.subr.mxu0 0.0
    %288 = vmatpush2.xpose.msra.mxu0 0.0
    %289 = vmatprep.subr.mxu0 0.0
    %290 = vmatpush2.xpose.msra.mxu0 0.0
    %291 = vmatprep.subr.mxu0 0.0
    %292 = vmatpush2.xpose.msra.mxu0 0.0
    %293 = vmatprep.subr.mxu0 0.0
    %294 = vmatpush2.xpose.msra.mxu0 0.0
    %295 = vmatprep.subr.mxu0 0.0
    %296 = vmatpush2.xpose.msra.mxu0 0.0
    %297 = vmatprep.mubr.f32.mxu0 0.0
    %298 = vmatmul.mubr.f32.gmra.mxu0 %v222
    %v299 = vpop.f32.mrf.mxu0
    %v300 = vadd.f32 %v232, %v299
    %v301 = vpop.f32.mrf.mxu0
    %302 = vdwg.mxu0
    %vm303 = vcmask 122880
    %304 = vst.msk [vmem:[#allocation3] sm:$0x1] %vm303, %v300
    // Predicated region
    $region30: #{discriminator_forward.1} parent=1 // pred_check
      _
    $region31: #{discriminator_forward.1} parent=1 // pred_check_branch
      %306 = sbr.rel (0) target = $region33
    $region32: #{discriminator_forward.1} parent=1 // pred_region
      %s308 = ssub.s32 16, 16
      %309 = vsyncadd [#allocation4], %s308
      %s311 = sshll.u32 [#allocation3], 4
      %s312 = int_to_ptr.vmem [resolvable:$true] %s311
      %314 = dma.vmem_to_hbm [thread:$0]  %s312, 16, %s7, [#allocation4]
    $region33: #{discriminator_forward.1} parent=1 // pred_fallthru
      _
    // Predicated region
    $region34: #{discriminator_forward.1} parent=1 // pred_check
      _
    $region35: #{discriminator_forward.1} parent=1 // pred_check_branch
      %316 = sbr.rel (0) target = $region37
    $region36: #{discriminator_forward.1} parent=1 // pred_region
      %317 = dma.done [#allocation4], 16
    $region37: #{discriminator_forward.1} parent=1 // pred_fallthru
      _
    %318 = vsyncpa [#allocation4], 1

</llo_original>
